<compile_context>
chip_gen: v6e
topology: v6e:2x2x1
jax: 0.10.0
libtpu: 0.0.40
codegen_flags: <defaults>
</compile_context>

<pallas_src>
import functools

import jax
import jax.numpy as jnp
from jax.experimental import pallas as pl
from jax.experimental.pallas import tpu as pltpu


def age_embed_kernel(ids_ref, emb_ref, out_ref):
    """One grid step: gather a (tN, E) tile of embedding rows via one-hot @ table."""
    ids = ids_ref[...]                                      # (tN, 1) int32
    vocab = emb_ref.shape[0]
    # Single lane-iota row; compare broadcasts (1, V) vs (tN, 1) -> (tN, V).
    iota = jax.lax.broadcasted_iota(jnp.int32, (1, vocab), 1)
    onehot = (iota == ids).astype(jnp.float32)              # (tN, V)
    # HIGHEST precision keeps the f32 table rows bit-exact through the MXU.
    out_ref[...] = jnp.dot(
        onehot,
        emb_ref[...],
        preferred_element_type=jnp.float32,
        precision=jax.lax.Precision.HIGHEST,
    ).astype(out_ref.dtype)                                 # (tN, E)


@functools.partial(jax.jit, static_argnames=("tile_rows",))
def age_embed(age, emb_table, *, tile_rows=1024):
    """age: (B, S) integer indices; emb_table: (V, E) float32 -> (B, S, E) float32."""
    B, S = age.shape
    V, E = emb_table.shape
    N = B * S

    # Row tile: multiple of 8 sublanes, capped at N (no host-side padding; the
    # ragged last block, if any, is handled by Pallas' masked partial store).
    tN = max(8, (min(int(tile_rows), N) // 8) * 8)
    grid = (pl.cdiv(N, tN),)

    ids = age.astype(jnp.int32).reshape(N, 1)

    # Scoped-VMEM budget: double-buffered output + ids tiles, double-buffered
    # resident table, plus slack for compiler scratch.
    vmem_bytes = 2 * (tN * E * 4 + tN * 4 + V * E * 4) + (4 << 20)
    vmem_bytes = int(min(max(vmem_bytes, 16 << 20), 64 << 20))

    cost = pl.CostEstimate(
        flops=2 * grid[0] * tN * V * E,
        transcendentals=0,
        bytes_accessed=N * 4 + V * E * 4 + N * E * 4,
    )

    out = pl.pallas_call(
        age_embed_kernel,
        out_shape=jax.ShapeDtypeStruct((N, E), jnp.float32),
        grid_spec=pltpu.PrefetchScalarGridSpec(
            num_scalar_prefetch=0,
            grid=grid,
            in_specs=[
                pl.BlockSpec((tN, 1), lambda i: (i, 0)),    # ids: streamed row tiles
                pl.BlockSpec((V, E), lambda i: (0, 0)),     # table: VMEM-resident
            ],
            out_specs=pl.BlockSpec((tN, E), lambda i: (i, 0)),
        ),
        compiler_params=pltpu.CompilerParams(
            dimension_semantics=("parallel",),
            vmem_limit_bytes=vmem_bytes,
        ),
        cost_estimate=cost,
    )(ids, emb_table)

    return out.reshape(B, S, E)


def init_params(key, age_vocab_size, embed_size):
    emb = jax.random.normal(key, (age_vocab_size, embed_size), jnp.float32)
    # padding_idx = 0 -> that embedding row is zero.
    emb = emb.at[0].set(0.0)
    return emb


if __name__ == "__main__":
    key = jax.random.PRNGKey(0)

    batch = 2
    seq = 8
    age_vocab_size = 32
    embed_size = 128            # multiple of 128 -> lane-dense output tiles

    k_idx, k_emb, k_idx2 = jax.random.split(key, 3)
    age = jax.random.randint(k_idx, (batch, seq), 0, age_vocab_size, jnp.int32)
    age = age.at[0, 0].set(0)   # exercise the padding index
    emb_table = init_params(k_emb, age_vocab_size, embed_size)

    # tile_rows=8 -> an even, multi-step (2-step) parallel grid at this tiny size.
    out = age_embed(age, emb_table, tile_rows=8)
    out = jax.block_until_ready(out)

    ref = emb_table[age]                               # (B, S, E)
    assert out.shape == (batch, seq, embed_size), out.shape
    assert out.dtype == jnp.float32
    assert jnp.allclose(out, ref, atol=1e-6), "mismatch vs reference"
    assert jnp.allclose(out[0, 0], 0.0), "padding_idx row must be zero"

    # Ragged case: N = 15 is not a multiple of tN = 8 -> exercises the masked
    # partial last-block store (no host padding, no output slice).
    age_r = jax.random.randint(k_idx2, (3, 5), 0, age_vocab_size, jnp.int32)
    out_r = jax.block_until_ready(age_embed(age_r, emb_table, tile_rows=8))
    assert out_r.shape == (3, 5, embed_size)
    assert jnp.allclose(out_r, emb_table[age_r], atol=1e-6), "ragged-grid mismatch"

    print("KERNEL_OK")
</pallas_src>

<mosaic_0001>
module attributes {stable_mosaic.version = 11 : i64} {
  func.func @age_embed_kernel(%arg0: i32, %arg1: memref<8x1xi32, #tpu.memory_space<vmem>>, %arg2: memref<32x128xf32, #tpu.memory_space<vmem>>, %arg3: memref<8x128xf32, #tpu.memory_space<vmem>>) attributes {dimension_semantics = [#tpu.dimension_semantics<parallel>], iteration_bounds = array<i64: 2>, scalar_prefetch = 0 : i64, scratch_operands = 0 : i64, tpu.core_type = #tpu.core_type<tc>, window_params = [{transform_indices = @transform_0, window_bounds = array<i64: 8, 1>}, {pipeline_mode = #tpu.pipeline_mode<synchronous>, transform_indices = @transform_1, window_bounds = array<i64: 32, 128>}, {transform_indices = @transform_2, window_bounds = array<i64: 8, 128>}]} {
    %c0 = arith.constant 0 : index
    %c0_0 = arith.constant 0 : index
    %0 = vector.load %arg1[%c0, %c0_0] : memref<8x1xi32, #tpu.memory_space<vmem>>, vector<8x1xi32>
    %1 = tpu.iota {dimensions = array<i32: 1>} : vector<1x32xi32>
    %2 = vector.broadcast %1 : vector<1x32xi32> to vector<8x32xi32>
    %3 = vector.broadcast %0 : vector<8x1xi32> to vector<8x32xi32>
    %4 = arith.cmpi eq, %2, %3 : vector<8x32xi32>
    %5 = arith.extui %4 : vector<8x32xi1> to vector<8x32xi32>
    %6 = arith.sitofp %5 : vector<8x32xi32> to vector<8x32xf32>
    %c0_1 = arith.constant 0 : index
    %c0_2 = arith.constant 0 : index
    %7 = vector.load %arg2[%c0_1, %c0_2] : memref<32x128xf32, #tpu.memory_space<vmem>>, vector<32x128xf32>
    %cst = arith.constant dense<0.000000e+00> : vector<8x128xf32>
    %8 = tpu.matmul %6, %7, %cst {dimension_numbers = #tpu.dot_dimension_numbers<[1], [0], [0], [1], [0, 0, 1, 1], [], []>, precision = #tpu.contract_precision<fp32>} : vector<8x32xf32>, vector<32x128xf32>, vector<8x128xf32> -> vector<8x128xf32>
    %c0_3 = arith.constant 0 : index
    %c0_4 = arith.constant 0 : index
    %9 = vector.load %arg3[%c0_3, %c0_4] : memref<8x128xf32, #tpu.memory_space<vmem>>, vector<8x128xf32>
    tpu.vector_store %arg3[%c0_3, %c0_4], %8 {strides = array<i32>} : memref<8x128xf32, #tpu.memory_space<vmem>>, vector<8x128xf32>,
    return
  }
  func.func @transform_0(%arg0: i32) -> (i32, i32) {
    %c0_i32 = arith.constant 0 : i32
    %c0_i32_0 = arith.constant 0 : i32
    return %arg0, %c0_i32 : i32, i32
  }
  func.func @transform_1(%arg0: i32) -> (i32, i32) {
    %c0_i32 = arith.constant 0 : i32
    %c0_i32_0 = arith.constant 0 : i32
    %c0_i32_1 = arith.constant 0 : i32
    return %c0_i32, %c0_i32_0 : i32, i32
  }
  func.func @transform_2(%arg0: i32) -> (i32, i32) {
    %c0_i32 = arith.constant 0 : i32
    %c0_i32_0 = arith.constant 0 : i32
    return %arg0, %c0_i32 : i32, i32
  }
}

</mosaic_0001>

<llo_original>
// kernel: age_embed.1
$region0: #{age_embed.1}
  #allocation0 [shape = 'u32[]', space=smem, size = 0x4, offset = 0x4, fixed_abs, tag = 'smem constant byte address 0x4 - core index']
  #allocation1 [shape = 'u32[144,128]{1,0:T(1,128)}', space=vmem, size = 0x12000, scoped, tag = 'internal scratch']
  %s0 = inlined_call_operand.vmem [shape: s32[16,1], index: 0, kind: input, shape index: {}]
  %s1 = inlined_call_operand.hbm [shape: f32[32,128], index: 1, kind: input, shape index: {}]
  %s2 = inlined_call_operand.hbm [shape: f32[16,128], index: 2, kind: output, shape index: {}]
  %s3 = sld [smem:[#allocation0]]
  $region45: #{age_embed.1} parent=0
    _
  %s5 = ssub.s32 1, %s3
  %s6 = scalar_select 0, %s5, %s3
  $region1: #{age_embed.1} parent=0
    #allocation2 [shape = 'u8[16384]{0}', space=vmem, size = 0x4000, scoped, tag = 'input window, operand 1, single buffered']
    #allocation3 [shape = 's32[2]{0}', space=sflag, size = 0x8, scoped, tag = 'scoped memory for age_embed.1']
    #allocation4 [shape = 's32[2]{0}', space=sflag, size = 0x8, scoped, tag = 'scoped memory for age_embed.1']
    #allocation5 [shape = 'u8[8192]{0}', space=vmem, size = 0x2000, scoped, tag = 'output window, operand 0']
    %7 = vsyncpa [#allocation3], 0
    %8 = vsyncpa [#allocation4], 0
    %s9 = scalar_lea.sflag [#allocation4], 1
    %10 = vsyncpa %s9, 0
    loop: start=0, step=1, limit=4
    $region2: #{age_embed.1} parent=1 // loop_pre_header
      _
    $region3: #{age_embed.1} parent=1 // loop_header
      %s12 = sphi 0, %s16
      %p13 = scmp.ge.s32.totalorder %s12, 4
      %s22 = sphi 0, %s24
      %s25 = sphi 0, %s22
      %s26 = sphi 0, %s25
      %s42 = sphi 0, %s26
      %s46 = sphi 0, %s46
      %s48 = sphi 0, %s46
      %s49 = sphi 0, %s48
      %s63 = sphi 0, %s49
      %s69 = sphi 0, %s71
      %s72 = sphi 0, %s69
      %s73 = sphi 0, %s72
      %s89 = sphi 0, %s73
    $region4: #{age_embed.1} parent=1 // loop_header_branch
      %15 = sbr.rel (%p13) target = $region8
    $region5: #{age_embed.1} parent=1 // loop_body
      %s17 = ssub.s32 %s12, 1
      %s18 = ssub.s32 %s12, 2
      %s19 = sadd.s32 %s12, 1
      %s20 = ssub.s32 %s12, %s19
      %p21 = scmp.eq.s32.totalorder %s20, 0
      %s23 = sadd.s32 %s22, 1
      %s24 = scalar_select %p21, %s22, %s23
      %p27 = pneg %p21
      %p28 = scmp.eq.s32.totalorder %s12, 1
      %p29 = por %p27, %p28
      %p30 = scmp.ne.s32.totalorder %s22, %s25
      %p31 = scmp.eq.s32.totalorder %s12, 0
      %p32 = por %p30, %p31
      %p33 = scmp.ne.s32.totalorder %s22, %s25
      %p34 = scmp.eq.s32.totalorder %s17, 1
      %p35 = por %p33, %p34
      %p36 = scmp.ne.s32.totalorder %s25, %s26
      %p37 = scmp.eq.s32.totalorder %s17, 0
      %p38 = por %p36, %p37
      %p39 = scmp.ne.s32.totalorder %s25, %s26
      %p40 = scmp.eq.s32.totalorder %s18, 1
      %p41 = por %p39, %p40
      %p43 = scmp.ne.s32.totalorder %s26, %s42
      %p44 = scmp.eq.s32.totalorder %s18, 0
      %p45 = por %p43, %p44
      %s47 = sadd.s32 %s46, 1
      %p50 = scmp.eq.s32.totalorder %s12, 1
      %p51 = scmp.ne.s32.totalorder %s46, %s48
      %p52 = scmp.eq.s32.totalorder %s12, 0
      %p53 = por %p51, %p52
      %p54 = scmp.ne.s32.totalorder %s46, %s48
      %p55 = scmp.eq.s32.totalorder %s17, 1
      %p56 = por %p54, %p55
      %p57 = scmp.ne.s32.totalorder %s48, %s49
      %p58 = scmp.eq.s32.totalorder %s17, 0
      %p59 = por %p57, %p58
      %p60 = scmp.ne.s32.totalorder %s48, %s49
      %p61 = scmp.eq.s32.totalorder %s18, 1
      %p62 = por %p60, %p61
      %p64 = scmp.ne.s32.totalorder %s49, %s63
      %p65 = scmp.eq.s32.totalorder %s18, 0
      %p66 = por %p64, %p65
      %s67 = ssub.s32 %s12, %s19
      %p68 = scmp.eq.s32.totalorder %s67, 0
      %s70 = sadd.s32 %s69, 1
      %s71 = scalar_select %p68, %s69, %s70
      %p74 = pneg %p68
      %p75 = scmp.eq.s32.totalorder %s12, 1
      %p76 = por %p74, %p75
      %p77 = scmp.ne.s32.totalorder %s69, %s72
      %p78 = scmp.eq.s32.totalorder %s12, 0
      %p79 = por %p77, %p78
      %p80 = scmp.ne.s32.totalorder %s69, %s72
      %p81 = scmp.eq.s32.totalorder %s17, 1
      %p82 = por %p80, %p81
      %p83 = scmp.ne.s32.totalorder %s72, %s73
      %p84 = scmp.eq.s32.totalorder %s17, 0
      %p85 = por %p83, %p84
      %p86 = scmp.ne.s32.totalorder %s72, %s73
      %p87 = scmp.eq.s32.totalorder %s18, 1
      %p88 = por %p86, %p87
      %p90 = scmp.ne.s32.totalorder %s73, %s89
      %p91 = scmp.eq.s32.totalorder %s18, 0
      %p92 = por %p90, %p91
      %p93 = scmp.le.s32.totalorder 1, %s12
      %p94 = scmp.lt.s32.totalorder %s12, 3
      %p95 = pnand %p93, %p94
      %p96 = pneg %p95
      // Predicated region
      $region9: #{age_embed.1} parent=5 // pred_check
        _
      $region10: #{age_embed.1} parent=5 // pred_check_branch
        %98 = sbr.rel (%p95) target = $region12
      $region11: #{age_embed.1} parent=5 // pred_region
        %s99 = ssub.s32 %s12, 1
        // Predicated region
        $region13: #{age_embed.1} parent=11 // pred_check
          %p100 = pneg %p59
        $region14: #{age_embed.1} parent=11 // pred_check_branch
          %102 = sbr.rel (%p100) target = $region16
        $region15: #{age_embed.1} parent=11 // pred_region
          %s104 = ssub.s32 512, 512
          %105 = vsyncadd [#allocation3], %s104
          %s106 = sshll.u32 [#allocation2], 4
          %s107 = int_to_ptr.vmem [resolvable:$true] %s106
          %112 = dma.hbm_to_vmem [thread:$0]  %s1, 512, %s107, [#allocation3], 128, 128, 8
        $region16: #{age_embed.1} parent=11 // pred_fallthru
          _
      $region12: #{age_embed.1} parent=5 // pred_fallthru
        _
      %p113 = scmp.lt.s32.totalorder %s12, 2
      // Predicated region
      $region17: #{age_embed.1} parent=5 // pred_check
        %p114 = pneg %p113
      $region18: #{age_embed.1} parent=5 // pred_check_branch
        %116 = sbr.rel (%p114) target = $region20
      $region19: #{age_embed.1} parent=5 // pred_region
        // Predicated region
        $region21: #{age_embed.1} parent=19 // pred_check
          %p117 = pneg %p32
        $region22: #{age_embed.1} parent=19 // pred_check_branch
          %119 = sbr.rel (%p117) target = $region24
        $region23: #{age_embed.1} parent=19 // pred_region
          %p120 = scmp.lt.s32.totalorder %s12, 1
          %s121 = scalar_select %p120, %s12, 1
          %s122 = smul.addr %s121, 8
          %s123 = scalar_lea.vmem %s0, %s122
        $region24: #{age_embed.1} parent=19 // pred_fallthru
          _
      $region20: #{age_embed.1} parent=5 // pred_fallthru
        _
      %p124 = scmp.le.s32.totalorder 1, %s12
      %p125 = scmp.lt.s32.totalorder %s12, 3
      %p126 = pnand %p124, %p125
      %p127 = pneg %p126
      // Predicated region
      $region25: #{age_embed.1} parent=5 // pred_check
        _
      $region26: #{age_embed.1} parent=5 // pred_check_branch
        %129 = sbr.rel (%p126) target = $region28
      $region27: #{age_embed.1} parent=5 // pred_region
        %s130 = ssub.s32 %s12, 1
        // Predicated region
        $region29: #{age_embed.1} parent=27 // pred_check
          %p131 = pneg %p59
        $region30: #{age_embed.1} parent=27 // pred_check_branch
          %133 = sbr.rel (%p131) target = $region32
        $region31: #{age_embed.1} parent=27 // pred_region
          %134 = dma.done [#allocation3], 512
        $region32: #{age_embed.1} parent=27 // pred_fallthru
          _
        %p135 = scmp.lt.s32.totalorder %s17, 1
        %s136 = scalar_select %p135, %s17, 1
        %s137 = smul.addr %s136, 8
        %s138 = scalar_lea.vmem %s0, %s137
        %p139 = pneg %p38
        %p140 = pneg %p35
        %p141 = pneg %p59
        %p142 = pneg %p56
        %p143 = pneg %p85
        %p144 = pneg %p82
        %s145 = sand.u32 %s72, 1
        %s146 = scalar_lea.sflag [#allocation4], %s145
        %s147 = sand.u32 %s72, 1
        %s148 = smul.addr %s147, 8
        %s149 = scalar_lea.vmem [#allocation5], %s148
        %p150 = scmp.lt.s32.totalorder %s17, 1
        %s151 = scalar_select %p150, %s17, 1
        %s152 = smul.addr %s151, 8
        %s153 = scalar_lea.vmem %s0, %s152
        %v154 = vld [vmem:[%s153] sm:$0xff]
        %v155 = vlaneseq
        %v156 = vand.u32 %v155, 127
        %157 = vset.pattern.permute.xlu0 0
        %158 = vperm.xlu0 %157, %v154
        %v159 = vpop.permute.xlu0 %158
        %vm160 = vcmp.eq.s32.totalorder %v156, %v159
        %v161 = vsel %vm160, 1, 0
        %v162 = vcvt.s32.f32 %v161
        %v163 = vld [vmem:[#allocation2] sm:$0xff]
        %v164 = vld [vmem:[#allocation2 + $0x8] sm:$0xff]
        %v165 = vld [vmem:[#allocation2 + $0x10] sm:$0xff]
        %v166 = vld [vmem:[#allocation2 + $0x18] sm:$0xff]
        %vm167 = vcmask 261120
        %v169 = vsel %vm167, %v162, 0
        %171 = vmatprep.subr.mxu0 0.0
        %172 = vmatpush1.msra.mxu0 0.0
        %173 = vmatprep.subr.mxu0 0.0
        %174 = vmatpush1.msra.mxu0 0.0
        %175 = vmatprep.subr.mxu0 0.0
        %176 = vmatpush1.msra.mxu0 0.0
        %177 = vmatprep.subr.mxu0 0.0
        %178 = vmatpush1.msra.mxu0 0.0
        %179 = vmatprep.subr.mxu0 0.0
        %180 = vmatpush1.msra.mxu0 0.0
        %181 = vmatprep.subr.mxu0 0.0
        %182 = vmatpush1.msra.mxu0 0.0
        %183 = vmatprep.subr.mxu0 0.0
        %184 = vmatpush1.msra.mxu0 0.0
        %185 = vmatprep.subr.mxu0 0.0
        %186 = vmatpush1.msra.mxu0 0.0
        %187 = vmatprep.subr.mxu0 0.0
        %188 = vmatpush1.msra.mxu0 0.0
        %189 = vmatprep.subr.mxu0 0.0
        %190 = vmatpush1.msra.mxu0 0.0
        %191 = vmatprep.subr.mxu0 0.0
        %192 = vmatpush1.msra.mxu0 0.0
        %193 = vmatprep.subr.mxu0 0.0
        %194 = vmatpush1.msra.mxu0 0.0
        %195 = vmatprep.subr.mxu0 0.0
        %v196 = vand.u32 %v166, 4294901760
        %197 = vmatpush1.msra.mxu0 %v196
        %198 = vmatprep.subr.mxu0 0.0
        %v199 = vand.u32 %v165, 4294901760
        %200 = vmatpush1.msra.mxu0 %v199
        %201 = vmatprep.subr.mxu0 0.0
        %v202 = vand.u32 %v164, 4294901760
        %203 = vmatpush1.msra.mxu0 %v202
        %204 = vmatprep.subr.mxu0 0.0
        %v205 = vand.u32 %v163, 4294901760
        %206 = vmatpush1.msra.mxu0 %v205
        %207 = vmatprep.subr.mxu0 0.0
        %208 = vmatpush2.msra.mxu0 0.0
        %209 = vmatprep.subr.mxu0 0.0
        %210 = vmatpush2.msra.mxu0 0.0
        %211 = vmatprep.subr.mxu0 0.0
        %212 = vmatpush2.msra.mxu0 0.0
        %213 = vmatprep.subr.mxu0 0.0
        %214 = vmatpush2.msra.mxu0 0.0
        %215 = vmatprep.subr.mxu0 0.0
        %216 = vmatpush2.msra.mxu0 0.0
        %217 = vmatprep.subr.mxu0 0.0
        %218 = vmatpush2.msra.mxu0 0.0
        %219 = vmatprep.subr.mxu0 0.0
        %220 = vmatpush2.msra.mxu0 0.0
        %221 = vmatprep.subr.mxu0 0.0
        %222 = vmatpush2.msra.mxu0 0.0
        %223 = vmatprep.subr.mxu0 0.0
        %224 = vmatpush2.msra.mxu0 0.0
        %225 = vmatprep.subr.mxu0 0.0
        %226 = vmatpush2.msra.mxu0 0.0
        %227 = vmatprep.subr.mxu0 0.0
        %228 = vmatpush2.msra.mxu0 0.0
        %229 = vmatprep.subr.mxu0 0.0
        %230 = vmatpush2.msra.mxu0 0.0
        %231 = vmatprep.subr.mxu0 0.0
        %232 = vmatpush2.msra.mxu0 0.0
        %233 = vmatprep.subr.mxu0 0.0
        %234 = vmatpush2.msra.mxu0 0.0
        %235 = vmatprep.subr.mxu0 0.0
        %236 = vmatpush2.msra.mxu0 0.0
        %237 = vmatprep.subr.mxu0 0.0
        %238 = vmatpush2.msra.mxu0 0.0
        %239 = vmatprep.mubr.f32.mxu0 0.0
        %v240 = vand.u32 %v169, 4294901760
        %v241 = vsub.f32 %v169, %v240
        %v242 = vand.u32 %v241, 4294901760
        %v243 = vsub.f32 %v241, %v242
        %v244 = vand.u32 %v243, 4294901760
        %245 = vmatmul.mubr.f32.gmra.mxu0 %v244
        %v246 = vpop.f32.mrf.mxu0
        %v247 = vadd.f32 0.0, %v246
        %v248 = vpop.f32.mrf.mxu0
        %249 = vdwg.mxu0
        %250 = vmatprep.subr.mxu0 0.0
        %251 = vmatpush1.msra.mxu0 0.0
        %252 = vmatprep.subr.mxu0 0.0
        %253 = vmatpush1.msra.mxu0 0.0
        %254 = vmatprep.subr.mxu0 0.0
        %255 = vmatpush1.msra.mxu0 0.0
        %256 = vmatprep.subr.mxu0 0.0
        %257 = vmatpush1.msra.mxu0 0.0
        %258 = vmatprep.subr.mxu0 0.0
        %259 = vmatpush1.msra.mxu0 0.0
        %260 = vmatprep.subr.mxu0 0.0
        %261 = vmatpush1.msra.mxu0 0.0
        %262 = vmatprep.subr.mxu0 0.0
        %263 = vmatpush1.msra.mxu0 0.0
        %264 = vmatprep.subr.mxu0 0.0
        %265 = vmatpush1.msra.mxu0 0.0
        %266 = vmatprep.subr.mxu0 0.0
        %267 = vmatpush1.msra.mxu0 0.0
        %268 = vmatprep.subr.mxu0 0.0
        %269 = vmatpush1.msra.mxu0 0.0
        %270 = vmatprep.subr.mxu0 0.0
        %271 = vmatpush1.msra.mxu0 0.0
        %272 = vmatprep.subr.mxu0 0.0
        %273 = vmatpush1.msra.mxu0 0.0
        %274 = vmatprep.subr.mxu0 0.0
        %v275 = vand.u32 %v166, 4294901760
        %v276 = vsub.f32 %v166, %v275
        %v277 = vand.u32 %v276, 4294901760
        %v278 = vsub.f32 %v276, %v277
        %v279 = vand.u32 %v278, 4294901760
        %280 = vmatpush1.msra.mxu0 %v279
        %281 = vmatprep.subr.mxu0 0.0
        %v282 = vand.u32 %v165, 4294901760
        %v283 = vsub.f32 %v165, %v282
        %v284 = vand.u32 %v283, 4294901760
        %v285 = vsub.f32 %v283, %v284
        %v286 = vand.u32 %v285, 4294901760
        %287 = vmatpush1.msra.mxu0 %v286
        %288 = vmatprep.subr.mxu0 0.0
        %v289 = vand.u32 %v164, 4294901760
        %v290 = vsub.f32 %v164, %v289
        %v291 = vand.u32 %v290, 4294901760
        %v292 = vsub.f32 %v290, %v291
        %v293 = vand.u32 %v292, 4294901760
        %294 = vmatpush1.msra.mxu0 %v293
        %295 = vmatprep.subr.mxu0 0.0
        %v296 = vand.u32 %v163, 4294901760
        %v297 = vsub.f32 %v163, %v296
        %v298 = vand.u32 %v297, 4294901760
        %v299 = vsub.f32 %v297, %v298
        %v300 = vand.u32 %v299, 4294901760
        %301 = vmatpush1.msra.mxu0 %v300
        %302 = vmatprep.subr.mxu0 0.0
        %303 = vmatpush2.msra.mxu0 0.0
        %304 = vmatprep.subr.mxu0 0.0
        %305 = vmatpush2.msra.mxu0 0.0
        %306 = vmatprep.subr.mxu0 0.0
        %307 = vmatpush2.msra.mxu0 0.0
        %308 = vmatprep.subr.mxu0 0.0
        %309 = vmatpush2.msra.mxu0 0.0
        %310 = vmatprep.subr.mxu0 0.0
        %311 = vmatpush2.msra.mxu0 0.0
        %312 = vmatprep.subr.mxu0 0.0
        %313 = vmatpush2.msra.mxu0 0.0
        %314 = vmatprep.subr.mxu0 0.0
        %315 = vmatpush2.msra.mxu0 0.0
        %316 = vmatprep.subr.mxu0 0.0
        %317 = vmatpush2.msra.mxu0 0.0
        %318 = vmatprep.subr.mxu0 0.0
        %319 = vmatpush2.msra.mxu0 0.0
        %320 = vmatprep.subr.mxu0 0.0
        %321 = vmatpush2.msra.mxu0 0.0
        %322 = vmatprep.subr.mxu0 0.0
        %323 = vmatpush2.msra.mxu0 0.0
        %324 = vmatprep.subr.mxu0 0.0
        %325 = vmatpush2.msra.mxu0 0.0
        %326 = vmatprep.subr.mxu0 0.0
        %327 = vmatpush2.msra.mxu0 0.0
        %328 = vmatprep.subr.mxu0 0.0
        %329 = vmatpush2.msra.mxu0 0.0
        %330 = vmatprep.subr.mxu0 0.0
        %331 = vmatpush2.msra.mxu0 0.0
        %332 = vmatprep.subr.mxu0 0.0
        %333 = vmatpush2.msra.mxu0 0.0
        %334 = vmatprep.mubr.f32.mxu0 0.0
        %v335 = vand.u32 %v169, 4294901760
        %336 = vmatmul.mubr.f32.gmra.mxu0 %v335
        %v337 = vpop.f32.mrf.mxu0
        %v338 = vadd.f32 %v247, %v337
        %v339 = vpop.f32.mrf.mxu0
        %340 = vdwg.mxu0
        %341 = vmatprep.subr.mxu0 0.0
        %342 = vmatpush1.msra.mxu0 0.0
        %343 = vmatprep.subr.mxu0 0.0
        %344 = vmatpush1.msra.mxu0 0.0
        %345 = vmatprep.subr.mxu0 0.0
        %346 = vmatpush1.msra.mxu0 0.0
        %347 = vmatprep.subr.mxu0 0.0
        %348 = vmatpush1.msra.mxu0 0.0
        %349 = vmatprep.subr.mxu0 0.0
        %350 = vmatpush1.msra.mxu0 0.0
        %351 = vmatprep.subr.mxu0 0.0
        %352 = vmatpush1.msra.mxu0 0.0
        %353 = vmatprep.subr.mxu0 0.0
        %354 = vmatpush1.msra.mxu0 0.0
        %355 = vmatprep.subr.mxu0 0.0
        %356 = vmatpush1.msra.mxu0 0.0
        %357 = vmatprep.subr.mxu0 0.0
        %358 = vmatpush1.msra.mxu0 0.0
        %359 = vmatprep.subr.mxu0 0.0
        %360 = vmatpush1.msra.mxu0 0.0
        %361 = vmatprep.subr.mxu0 0.0
        %362 = vmatpush1.msra.mxu0 0.0
        %363 = vmatprep.subr.mxu0 0.0
        %364 = vmatpush1.msra.mxu0 0.0
        %365 = vmatprep.subr.mxu0 0.0
        %v366 = vand.u32 %v166, 4294901760
        %v367 = vsub.f32 %v166, %v366
        %368 = vmatpush1.msra.mxu0 %v367
        %369 = vmatprep.subr.mxu0 0.0
        %v370 = vand.u32 %v165, 4294901760
        %v371 = vsub.f32 %v165, %v370
        %372 = vmatpush1.msra.mxu0 %v371
        %373 = vmatprep.subr.mxu0 0.0
        %v374 = vand.u32 %v164, 4294901760
        %v375 = vsub.f32 %v164, %v374
        %376 = vmatpush1.msra.mxu0 %v375
        %377 = vmatprep.subr.mxu0 0.0
        %v378 = vand.u32 %v163, 4294901760
        %v379 = vsub.f32 %v163, %v378
        %380 = vmatpush1.msra.mxu0 %v379
        %381 = vmatprep.subr.mxu0 0.0
        %382 = vmatpush2.msra.mxu0 0.0
        %383 = vmatprep.subr.mxu0 0.0
        %384 = vmatpush2.msra.mxu0 0.0
        %385 = vmatprep.subr.mxu0 0.0
        %386 = vmatpush2.msra.mxu0 0.0
        %387 = vmatprep.subr.mxu0 0.0
        %388 = vmatpush2.msra.mxu0 0.0
        %389 = vmatprep.subr.mxu0 0.0
        %390 = vmatpush2.msra.mxu0 0.0
        %391 = vmatprep.subr.mxu0 0.0
        %392 = vmatpush2.msra.mxu0 0.0
        %393 = vmatprep.subr.mxu0 0.0
        %394 = vmatpush2.msra.mxu0 0.0
        %395 = vmatprep.subr.mxu0 0.0
        %396 = vmatpush2.msra.mxu0 0.0
        %397 = vmatprep.subr.mxu0 0.0
        %398 = vmatpush2.msra.mxu0 0.0
        %399 = vmatprep.subr.mxu0 0.0
        %400 = vmatpush2.msra.mxu0 0.0
        %401 = vmatprep.subr.mxu0 0.0
        %402 = vmatpush2.msra.mxu0 0.0
        %403 = vmatprep.subr.mxu0 0.0
        %404 = vmatpush2.msra.mxu0 0.0
        %405 = vmatprep.subr.mxu0 0.0
        %406 = vmatpush2.msra.mxu0 0.0
        %407 = vmatprep.subr.mxu0 0.0
        %408 = vmatpush2.msra.mxu0 0.0
        %409 = vmatprep.subr.mxu0 0.0
        %410 = vmatpush2.msra.mxu0 0.0
        %411 = vmatprep.subr.mxu0 0.0
        %412 = vmatpush2.msra.mxu0 0.0
        %413 = vmatprep.mubr.f32.mxu0 0.0
        %v414 = vand.u32 %v169, 4294901760
        %v415 = vsub.f32 %v169, %v414
        %416 = vmatmul.mubr.f32.gmra.mxu0 %v415
        %v417 = vpop.f32.mrf.mxu0
        %v418 = vadd.f32 %v338, %v417
        %v419 = vpop.f32.mrf.mxu0
        %420 = vdwg.mxu0
        %421 = vmatprep.subr.mxu0 0.0
        %422 = vmatpush1.msra.mxu0 0.0
        %423 = vmatprep.subr.mxu0 0.0
        %424 = vmatpush1.msra.mxu0 0.0
        %425 = vmatprep.subr.mxu0 0.0
        %426 = vmatpush1.msra.mxu0 0.0
        %427 = vmatprep.subr.mxu0 0.0
        %428 = vmatpush1.msra.mxu0 0.0
        %429 = vmatprep.subr.mxu0 0.0
        %430 = vmatpush1.msra.mxu0 0.0
        %431 = vmatprep.subr.mxu0 0.0
        %432 = vmatpush1.msra.mxu0 0.0
        %433 = vmatprep.subr.mxu0 0.0
        %434 = vmatpush1.msra.mxu0 0.0
        %435 = vmatprep.subr.mxu0 0.0
        %436 = vmatpush1.msra.mxu0 0.0
        %437 = vmatprep.subr.mxu0 0.0
        %438 = vmatpush1.msra.mxu0 0.0
        %439 = vmatprep.subr.mxu0 0.0
        %440 = vmatpush1.msra.mxu0 0.0
        %441 = vmatprep.subr.mxu0 0.0
        %442 = vmatpush1.msra.mxu0 0.0
        %443 = vmatprep.subr.mxu0 0.0
        %444 = vmatpush1.msra.mxu0 0.0
        %445 = vmatprep.subr.mxu0 0.0
        %v446 = vand.u32 %v166, 4294901760
        %447 = vmatpush1.msra.mxu0 %v446
        %448 = vmatprep.subr.mxu0 0.0
        %v449 = vand.u32 %v165, 4294901760
        %450 = vmatpush1.msra.mxu0 %v449
        %451 = vmatprep.subr.mxu0 0.0
        %v452 = vand.u32 %v164, 4294901760
        %453 = vmatpush1.msra.mxu0 %v452
        %454 = vmatprep.subr.mxu0 0.0
        %v455 = vand.u32 %v163, 4294901760
        %456 = vmatpush1.msra.mxu0 %v455
        %457 = vmatprep.subr.mxu0 0.0
        %458 = vmatpush2.msra.mxu0 0.0
        %459 = vmatprep.subr.mxu0 0.0
        %460 = vmatpush2.msra.mxu0 0.0
        %461 = vmatprep.subr.mxu0 0.0
        %462 = vmatpush2.msra.mxu0 0.0
        %463 = vmatprep.subr.mxu0 0.0
        %464 = vmatpush2.msra.mxu0 0.0
        %465 = vmatprep.subr.mxu0 0.0
        %466 = vmatpush2.msra.mxu0 0.0
        %467 = vmatprep.subr.mxu0 0.0
        %468 = vmatpush2.msra.mxu0 0.0
        %469 = vmatprep.subr.mxu0 0.0
        %470 = vmatpush2.msra.mxu0 0.0
        %471 = vmatprep.subr.mxu0 0.0
        %472 = vmatpush2.msra.mxu0 0.0
        %473 = vmatprep.subr.mxu0 0.0
        %474 = vmatpush2.msra.mxu0 0.0
        %475 = vmatprep.subr.mxu0 0.0
        %476 = vmatpush2.msra.mxu0 0.0
        %477 = vmatprep.subr.mxu0 0.0
        %478 = vmatpush2.msra.mxu0 0.0
        %479 = vmatprep.subr.mxu0 0.0
        %480 = vmatpush2.msra.mxu0 0.0
        %481 = vmatprep.subr.mxu0 0.0
        %482 = vmatpush2.msra.mxu0 0.0
        %483 = vmatprep.subr.mxu0 0.0
        %484 = vmatpush2.msra.mxu0 0.0
        %485 = vmatprep.subr.mxu0 0.0
        %486 = vmatpush2.msra.mxu0 0.0
        %487 = vmatprep.subr.mxu0 0.0
        %488 = vmatpush2.msra.mxu0 0.0
        %489 = vmatprep.mubr.f32.mxu0 0.0
        %v490 = vand.u32 %v169, 4294901760
        %v491 = vsub.f32 %v169, %v490
        %v492 = vand.u32 %v491, 4294901760
        %493 = vmatmul.mubr.f32.gmra.mxu0 %v492
        %v494 = vpop.f32.mrf.mxu0
        %v495 = vadd.f32 %v418, %v494
        %v496 = vpop.f32.mrf.mxu0
        %497 = vdwg.mxu0
        %498 = vmatprep.subr.mxu0 0.0
        %499 = vmatpush1.msra.mxu0 0.0
        %500 = vmatprep.subr.mxu0 0.0
        %501 = vmatpush1.msra.mxu0 0.0
        %502 = vmatprep.subr.mxu0 0.0
        %503 = vmatpush1.msra.mxu0 0.0
        %504 = vmatprep.subr.mxu0 0.0
        %505 = vmatpush1.msra.mxu0 0.0
        %506 = vmatprep.subr.mxu0 0.0
        %507 = vmatpush1.msra.mxu0 0.0
        %508 = vmatprep.subr.mxu0 0.0
        %509 = vmatpush1.msra.mxu0 0.0
        %510 = vmatprep.subr.mxu0 0.0
        %511 = vmatpush1.msra.mxu0 0.0
        %512 = vmatprep.subr.mxu0 0.0
        %513 = vmatpush1.msra.mxu0 0.0
        %514 = vmatprep.subr.mxu0 0.0
        %515 = vmatpush1.msra.mxu0 0.0
        %516 = vmatprep.subr.mxu0 0.0
        %517 = vmatpush1.msra.mxu0 0.0
        %518 = vmatprep.subr.mxu0 0.0
        %519 = vmatpush1.msra.mxu0 0.0
        %520 = vmatprep.subr.mxu0 0.0
        %521 = vmatpush1.msra.mxu0 0.0
        %522 = vmatprep.subr.mxu0 0.0
        %v523 = vand.u32 %v166, 4294901760
        %v524 = vsub.f32 %v166, %v523
        %v525 = vand.u32 %v524, 4294901760
        %526 = vmatpush1.msra.mxu0 %v525
        %527 = vmatprep.subr.mxu0 0.0
        %v528 = vand.u32 %v165, 4294901760
        %v529 = vsub.f32 %v165, %v528
        %v530 = vand.u32 %v529, 4294901760
        %531 = vmatpush1.msra.mxu0 %v530
        %532 = vmatprep.subr.mxu0 0.0
        %v533 = vand.u32 %v164, 4294901760
        %v534 = vsub.f32 %v164, %v533
        %v535 = vand.u32 %v534, 4294901760
        %536 = vmatpush1.msra.mxu0 %v535
        %537 = vmatprep.subr.mxu0 0.0
        %v538 = vand.u32 %v163, 4294901760
        %v539 = vsub.f32 %v163, %v538
        %v540 = vand.u32 %v539, 4294901760
        %541 = vmatpush1.msra.mxu0 %v540
        %542 = vmatprep.subr.mxu0 0.0
        %543 = vmatpush2.msra.mxu0 0.0
        %544 = vmatprep.subr.mxu0 0.0
        %545 = vmatpush2.msra.mxu0 0.0
        %546 = vmatprep.subr.mxu0 0.0
        %547 = vmatpush2.msra.mxu0 0.0
        %548 = vmatprep.subr.mxu0 0.0
        %549 = vmatpush2.msra.mxu0 0.0
        %550 = vmatprep.subr.mxu0 0.0
        %551 = vmatpush2.msra.mxu0 0.0
        %552 = vmatprep.subr.mxu0 0.0
        %553 = vmatpush2.msra.mxu0 0.0
        %554 = vmatprep.subr.mxu0 0.0
        %555 = vmatpush2.msra.mxu0 0.0
        %556 = vmatprep.subr.mxu0 0.0
        %557 = vmatpush2.msra.mxu0 0.0
        %558 = vmatprep.subr.mxu0 0.0
        %559 = vmatpush2.msra.mxu0 0.0
        %560 = vmatprep.subr.mxu0 0.0
        %561 = vmatpush2.msra.mxu0 0.0
        %562 = vmatprep.subr.mxu0 0.0
        %563 = vmatpush2.msra.mxu0 0.0
        %564 = vmatprep.subr.mxu0 0.0
        %565 = vmatpush2.msra.mxu0 0.0
        %566 = vmatprep.subr.mxu0 0.0
        %567 = vmatpush2.msra.mxu0 0.0
        %568 = vmatprep.subr.mxu0 0.0
        %569 = vmatpush2.msra.mxu0 0.0
        %570 = vmatprep.subr.mxu0 0.0
        %571 = vmatpush2.msra.mxu0 0.0
        %572 = vmatprep.subr.mxu0 0.0
        %573 = vmatpush2.msra.mxu0 0.0
        %574 = vmatprep.mubr.f32.mxu0 0.0
        %v575 = vand.u32 %v169, 4294901760
        %576 = vmatmul.mubr.f32.gmra.mxu0 %v575
        %v577 = vpop.f32.mrf.mxu0
        %v578 = vadd.f32 %v495, %v577
        %v579 = vpop.f32.mrf.mxu0
        %580 = vdwg.mxu0
        %581 = vmatprep.subr.mxu0 0.0
        %582 = vmatpush1.msra.mxu0 0.0
        %583 = vmatprep.subr.mxu0 0.0
        %584 = vmatpush1.msra.mxu0 0.0
        %585 = vmatprep.subr.mxu0 0.0
        %586 = vmatpush1.msra.mxu0 0.0
        %587 = vmatprep.subr.mxu0 0.0
        %588 = vmatpush1.msra.mxu0 0.0
        %589 = vmatprep.subr.mxu0 0.0
        %590 = vmatpush1.msra.mxu0 0.0
        %591 = vmatprep.subr.mxu0 0.0
        %592 = vmatpush1.msra.mxu0 0.0
        %593 = vmatprep.subr.mxu0 0.0
        %594 = vmatpush1.msra.mxu0 0.0
        %595 = vmatprep.subr.mxu0 0.0
        %596 = vmatpush1.msra.mxu0 0.0
        %597 = vmatprep.subr.mxu0 0.0
        %598 = vmatpush1.msra.mxu0 0.0
        %599 = vmatprep.subr.mxu0 0.0
        %600 = vmatpush1.msra.mxu0 0.0
        %601 = vmatprep.subr.mxu0 0.0
        %602 = vmatpush1.msra.mxu0 0.0
        %603 = vmatprep.subr.mxu0 0.0
        %604 = vmatpush1.msra.mxu0 0.0
        %605 = vmatprep.subr.mxu0 0.0
        %v606 = vand.u32 %v166, 4294901760
        %607 = vmatpush1.msra.mxu0 %v606
        %608 = vmatprep.subr.mxu0 0.0
        %v609 = vand.u32 %v165, 4294901760
        %610 = vmatpush1.msra.mxu0 %v609
        %611 = vmatprep.subr.mxu0 0.0
        %v612 = vand.u32 %v164, 4294901760
        %613 = vmatpush1.msra.mxu0 %v612
        %614 = vmatprep.subr.mxu0 0.0
        %v615 = vand.u32 %v163, 4294901760
        %616 = vmatpush1.msra.mxu0 %v615
        %617 = vmatprep.subr.mxu0 0.0
        %618 = vmatpush2.msra.mxu0 0.0
        %619 = vmatprep.subr.mxu0 0.0
        %620 = vmatpush2.msra.mxu0 0.0
        %621 = vmatprep.subr.mxu0 0.0
        %622 = vmatpush2.msra.mxu0 0.0
        %623 = vmatprep.subr.mxu0 0.0
        %624 = vmatpush2.msra.mxu0 0.0
        %625 = vmatprep.subr.mxu0 0.0
        %626 = vmatpush2.msra.mxu0 0.0
        %627 = vmatprep.subr.mxu0 0.0
        %628 = vmatpush2.msra.mxu0 0.0
        %629 = vmatprep.subr.mxu0 0.0
        %630 = vmatpush2.msra.mxu0 0.0
        %631 = vmatprep.subr.mxu0 0.0
        %632 = vmatpush2.msra.mxu0 0.0
        %633 = vmatprep.subr.mxu0 0.0
        %634 = vmatpush2.msra.mxu0 0.0
        %635 = vmatprep.subr.mxu0 0.0
        %636 = vmatpush2.msra.mxu0 0.0
        %637 = vmatprep.subr.mxu0 0.0
        %638 = vmatpush2.msra.mxu0 0.0
        %639 = vmatprep.subr.mxu0 0.0
        %640 = vmatpush2.msra.mxu0 0.0
        %641 = vmatprep.subr.mxu0 0.0
        %642 = vmatpush2.msra.mxu0 0.0
        %643 = vmatprep.subr.mxu0 0.0
        %644 = vmatpush2.msra.mxu0 0.0
        %645 = vmatprep.subr.mxu0 0.0
        %646 = vmatpush2.msra.mxu0 0.0
        %647 = vmatprep.subr.mxu0 0.0
        %648 = vmatpush2.msra.mxu0 0.0
        %649 = vmatprep.mubr.f32.mxu0 0.0
        %v650 = vand.u32 %v169, 4294901760
        %651 = vmatmul.mubr.f32.gmra.mxu0 %v650
        %v652 = vpop.f32.mrf.mxu0
        %v653 = vadd.f32 %v578, %v652
        %v654 = vpop.f32.mrf.mxu0
        %655 = vdwg.mxu0
        %656 = vst [vmem:[%s149] sm:$0xff] %v653
        %s657 = sand.u32 %s72, 1
        %s658 = scalar_lea.sflag [#allocation4], %s657
        %s659 = sand.u32 %s72, 1
        %s660 = smul.addr %s659, 8
        %s661 = scalar_lea.vmem [#allocation5], %s660
        // Predicated region
        $region33: #{age_embed.1} parent=27 // pred_check
          %p662 = pneg %p82
        $region34: #{age_embed.1} parent=27 // pred_check_branch
          %664 = sbr.rel (%p662) target = $region36
        $region35: #{age_embed.1} parent=27 // pred_region
          %s666 = ssub.s32 128, 128
          %667 = vsyncadd %s658, %s666
          %s668 = smul.addr %s17, 128
          %s669 = scalar_lea.hbm %s2, %s668
          %s671 = sshll.u32 %s661, 4
          %s672 = int_to_ptr.vmem [resolvable:$true] %s671
          %674 = dma.vmem_to_hbm [thread:$0]  %s672, 128, %s669, %s658
        $region36: #{age_embed.1} parent=27 // pred_fallthru
          _
      $region28: #{age_embed.1} parent=5 // pred_fallthru
        _
      %p675 = scmp.le.s32.totalorder 2, %s12
      // Predicated region
      $region37: #{age_embed.1} parent=5 // pred_check
        %p676 = pneg %p675
      $region38: #{age_embed.1} parent=5 // pred_check_branch
        %678 = sbr.rel (%p676) target = $region40
      $region39: #{age_embed.1} parent=5 // pred_region
        %s679 = ssub.s32 %s12, 2
        // Predicated region
        $region41: #{age_embed.1} parent=39 // pred_check
          %p680 = pneg %p88
        $region42: #{age_embed.1} parent=39 // pred_check_branch
          %682 = sbr.rel (%p680) target = $region44
        $region43: #{age_embed.1} parent=39 // pred_region
          %s683 = sand.u32 %s73, 1
          %s684 = scalar_lea.sflag [#allocation4], %s683
          %s685 = sand.u32 %s73, 1
          %s686 = smul.addr %s685, 8
          %s687 = scalar_lea.vmem [#allocation5], %s686
          %688 = dma.done %s684, 128
        $region44: #{age_embed.1} parent=39 // pred_fallthru
          _
      $region40: #{age_embed.1} parent=5 // pred_fallthru
        _
    $region6: #{age_embed.1} parent=1 // loop_footer
      %s16 = sadd.s32 1, %s12
    $region7: #{age_embed.1} parent=1 // loop_footer_branch
      %11 = sbr.rel target = $region3
    $region8: #{age_embed.1} parent=1 // loop_exit
      _
    %689 = vsyncpa [#allocation3], 1
    %s690 = scalar_lea.sflag [#allocation3], 1
    %691 = vsyncpa %s690, 1
    %692 = vsyncpa [#allocation4], 1
    %s693 = scalar_lea.sflag [#allocation4], 1
    %694 = vsyncpa %s693, 1

</llo_original>
